<compile_context>
chip_gen: v7x
topology: tpu7x:2x2x1
jax: 0.10.0
libtpu: 0.0.40
codegen_flags: <defaults>
</compile_context>

<pallas_src>
import math
from functools import partial

import numpy as np
import jax
import jax.numpy as jnp
from jax.experimental import pallas as pl
from jax.experimental.pallas import tpu as pltpu


# ---------------------------------------------------------------------------
# Kernel
# ---------------------------------------------------------------------------
def _prelayer_kernel(x_ref, wt_ref, bias_ref, o_ref):
    # x_ref   : (TB, S, F)  activation block (input dtype, e.g. f32)
    # wt_ref  : (F, F)      W.T in bf16 (matmul dtype)
    # bias_ref: (S, F)      PE @ W.T in f32 (exact PE contribution)
    # o_ref   : (TB, S, F)
    tb, s, f = x_ref.shape

    # Cast only the MXU operand to bf16 in VMEM; flatten leading dims into one
    # M axis feeding the MXU (pure layout no-op when S is a multiple of 8).
    xm = x_ref[...].astype(wt_ref.dtype).reshape(tb * s, f)
    y = jnp.dot(xm, wt_ref[...], preferred_element_type=jnp.float32)

    # f32 bias add on the VPU (broadcast over the batch-block dim), tanh on the
    # EUP, single store of the true-width output.
    y = y.reshape(tb, s, f) + bias_ref[...]
    o_ref[...] = jnp.tanh(y).astype(o_ref.dtype)


# ---------------------------------------------------------------------------
# pallas_call wrapper
# ---------------------------------------------------------------------------
@partial(jax.jit, static_argnames=("block_batch", "out_dtype"))
def _prelayer_call(x, wt_p, bias_p, *, block_batch, out_dtype):
    B, S, F = x.shape
    nb = pl.cdiv(B, block_batch)          # partial last block is masked by Pallas

    return pl.pallas_call(
        _prelayer_kernel,
        out_shape=jax.ShapeDtypeStruct((B, S, F), out_dtype),
        grid_spec=pltpu.PrefetchScalarGridSpec(
            num_scalar_prefetch=0,
            grid=(nb,),
            in_specs=[
                pl.BlockSpec((block_batch, S, F), lambda i: (i, 0, 0)),  # x
                pl.BlockSpec((F, F), lambda i: (0, 0)),                  # W.T (bf16)
                pl.BlockSpec((S, F), lambda i: (0, 0)),                  # PE @ W.T (f32)
            ],
            out_specs=pl.BlockSpec((block_batch, S, F), lambda i: (i, 0, 0)),
        ),
        compiler_params=pltpu.CompilerParams(
            dimension_semantics=("parallel",),     # shards batch blocks on v7x
            vmem_limit_bytes=48 * 1024 * 1024,     # leaves headroom on 64 MiB v7x
        ),
    )(x, wt_p, bias_p)


def _pick_block_batch(B, S, F, x_bytes, out_bytes, *,
                      target_rows=2048, act_vmem_budget=8 << 20):
    """How many batch elements per grid step.

    VMEM model per batch element in a block:
      2 x input block (double-buffered) + 2 x output block + in-kernel
      temporaries (bf16 copy of x + f32 matmul result, ~10 B/elem).
    """
    tb = max(1, target_rows // max(S, 1))
    per_b = S * F * (2 * x_bytes + 2 * out_bytes + 10)
    tb = max(1, min(tb, act_vmem_budget // max(per_b, 1)))
    if B >= 2:
        tb = min(tb, -(-B // 2))   # >= 2 grid steps so v7x can use both TCs
    return max(1, min(tb, B))


@jax.jit
def _prelayer_fallback(x, wt_p, bias_p):
    """Plain fused-XLA path for tiny problems (same numerics as the kernel)."""
    y = jnp.dot(x.astype(wt_p.dtype), wt_p, preferred_element_type=jnp.float32)
    return jnp.tanh(y + bias_p).astype(x.dtype)


def prelayer_forward(x, wt_p, bias_p, *, out_dtype=None, force_kernel=False,
                     small_cutoff=64 * 1024):
    """x: [B, S, F]. wt_p/bias_p from prepare_params. Returns tanh((x+PE) @ W.T)."""
    B, S, F = x.shape
    out_dtype = np.dtype(out_dtype if out_dtype is not None else x.dtype)

    if not force_kernel and B * S * F < small_cutoff:
        # Kernel launch + grid overhead dwarfs the work at these sizes.
        return _prelayer_fallback(x, wt_p, bias_p).astype(out_dtype)

    block_batch = _pick_block_batch(B, S, F,
                                    np.dtype(x.dtype).itemsize,
                                    out_dtype.itemsize)
    return _prelayer_call(x, wt_p, bias_p,
                          block_batch=block_batch, out_dtype=out_dtype)


# ---------------------------------------------------------------------------
# One-time parameter preparation (NOT in the per-call hot path)
# ---------------------------------------------------------------------------
def prepare_params(pe, w, *, matmul_dtype=jnp.bfloat16):
    """Build bf16 W.T for the MXU and the exact f32 bias PE @ W.T."""
    wt_p = w.T.astype(matmul_dtype)                                     # (F, F)
    bias_p = pe.astype(jnp.float32) @ w.T.astype(jnp.float32)           # (S, F) f32
    return wt_p, bias_p


def make_positional_encoding(seq_len, f_size, dtype=jnp.float32):
    """Standard sinusoidal positional encoding table, shape [seq_len, f_size]."""
    position = jnp.arange(seq_len, dtype=jnp.float32)[:, None]           # (S, 1)
    div_term = jnp.exp(
        jnp.arange(0, f_size, 2, dtype=jnp.float32)
        * (-math.log(10000.0) / f_size)
    )                                                                    # (F/2,)
    angles = position * div_term[None, :]                                # (S, F/2)
    pe = jnp.zeros((seq_len, f_size), dtype=jnp.float32)
    pe = pe.at[:, 0::2].set(jnp.sin(angles))
    pe = pe.at[:, 1::2].set(jnp.cos(angles))
    return pe.astype(dtype)


def reference_forward(x, pe, w):
    """Pure-JAX f32 reference matching the PyTorch module."""
    return jnp.tanh((x + pe[None]) @ w.T)


# ---------------------------------------------------------------------------
if __name__ == "__main__":
    key = jax.random.PRNGKey(0)
    kx, kw, kx2, kw2 = jax.random.split(key, 4)

    # --- Small shapes consistent with the module: batch=2, seq=8, f_size=32 ---
    B, S, F = 2, 8, 32
    x = jax.random.normal(kx, (B, S, F), dtype=jnp.float32)
    bound = 1.0 / math.sqrt(F)
    w = jax.random.uniform(kw, (F, F), minval=-bound, maxval=bound,
                           dtype=jnp.float32)
    pe = make_positional_encoding(S, F)
    wt_p, bias_p = prepare_params(pe, w)
    ref = reference_forward(x, pe, w)

    # Force the Pallas kernel at this tiny shape (production routing would send
    # it to the fused-XLA fallback).  bf16 matmul operand -> loosened tolerance.
    out = jax.block_until_ready(
        prelayer_forward(x, wt_p, bias_p, force_kernel=True))
    assert out.shape == (B, S, F)
    assert jnp.allclose(out, ref, atol=2e-2, rtol=2e-2), "kernel mismatch (small)"

    # Production path (small-problem cutoff -> fused XLA) must match too.
    out_fb = jax.block_until_ready(prelayer_forward(x, wt_p, bias_p))
    assert jnp.allclose(out_fb, ref, atol=2e-2, rtol=2e-2), "fallback mismatch"

    # --- Slightly larger case: multiple grid steps + a partial last block ---
    B2, S2, F2 = 5, 16, 128
    x2 = jax.random.normal(kx2, (B2, S2, F2), dtype=jnp.float32)
    bound2 = 1.0 / math.sqrt(F2)
    w2 = jax.random.uniform(kw2, (F2, F2), minval=-bound2, maxval=bound2,
                            dtype=jnp.float32)
    pe2 = make_positional_encoding(S2, F2)
    wt2_p, bias2_p = prepare_params(pe2, w2)
    out2 = jax.block_until_ready(
        prelayer_forward(x2, wt2_p, bias2_p, force_kernel=True))
    ref2 = reference_forward(x2, pe2, w2)
    assert out2.shape == (B2, S2, F2)
    assert jnp.allclose(out2, ref2, atol=5e-2, rtol=5e-2), "kernel mismatch (tiled)"

    print("KERNEL_OK")
</pallas_src>

<mosaic_0001>
module attributes {stable_mosaic.version = 11 : i64} {
  func.func @_prelayer_kernel(%arg0: i32, %arg1: memref<1x8x32xf32, #tpu.memory_space<vmem>>, %arg2: memref<32x32xbf16, #tpu.memory_space<vmem>>, %arg3: memref<8x32xf32, #tpu.memory_space<vmem>>, %arg4: memref<1x8x32xf32, #tpu.memory_space<vmem>>) attributes {dimension_semantics = [#tpu.dimension_semantics<parallel>], iteration_bounds = array<i64: 2>, scalar_prefetch = 0 : i64, scratch_operands = 0 : i64, tpu.core_type = #tpu.core_type<tc>, window_params = [{transform_indices = @transform_0, window_bounds = array<i64: 1, 8, 32>}, {pipeline_mode = #tpu.pipeline_mode<synchronous>, transform_indices = @transform_1, window_bounds = array<i64: 32, 32>}, {pipeline_mode = #tpu.pipeline_mode<synchronous>, transform_indices = @transform_2, window_bounds = array<i64: 8, 32>}, {transform_indices = @transform_3, window_bounds = array<i64: 1, 8, 32>}]} {
    %c0 = arith.constant 0 : index
    %c0_0 = arith.constant 0 : index
    %c0_1 = arith.constant 0 : index
    %0 = vector.load %arg1[%c0, %c0_0, %c0_1] : memref<1x8x32xf32, #tpu.memory_space<vmem>>, vector<1x8x32xf32>
    %1 = arith.truncf %0 : vector<1x8x32xf32> to vector<1x8x32xbf16>
    %2 = vector.shape_cast %1 : vector<1x8x32xbf16> to vector<8x32xbf16>
    %c0_2 = arith.constant 0 : index
    %c0_3 = arith.constant 0 : index
    %3 = vector.load %arg2[%c0_2, %c0_3] : memref<32x32xbf16, #tpu.memory_space<vmem>>, vector<32x32xbf16>
    %cst = arith.constant dense<0.000000e+00> : vector<8x32xf32>
    %4 = tpu.matmul %2, %3, %cst {dimension_numbers = #tpu.dot_dimension_numbers<[1], [0], [0], [1], [0, 0, 1, 1], [], []>} : vector<8x32xbf16>, vector<32x32xbf16>, vector<8x32xf32> -> vector<8x32xf32>
    %5 = vector.shape_cast %4 : vector<8x32xf32> to vector<1x8x32xf32>
    %c0_4 = arith.constant 0 : index
    %c0_5 = arith.constant 0 : index
    %6 = vector.load %arg3[%c0_4, %c0_5] : memref<8x32xf32, #tpu.memory_space<vmem>>, vector<8x32xf32>
    %7 = vector.shape_cast %6 : vector<8x32xf32> to vector<1x8x32xf32>
    %8 = arith.addf %5, %7 : vector<1x8x32xf32>
    %9 = math.tanh %8 : vector<1x8x32xf32>
    %c0_6 = arith.constant 0 : index
    %c0_7 = arith.constant 0 : index
    %c0_8 = arith.constant 0 : index
    %10 = vector.load %arg4[%c0_6, %c0_7, %c0_8] : memref<1x8x32xf32, #tpu.memory_space<vmem>>, vector<1x8x32xf32>
    tpu.vector_store %arg4[%c0_6, %c0_7, %c0_8], %9 {strides = array<i32>} : memref<1x8x32xf32, #tpu.memory_space<vmem>>, vector<1x8x32xf32>,
    return
  }
  func.func @transform_0(%arg0: i32) -> (i32, i32, i32) {
    %c0_i32 = arith.constant 0 : i32
    %c0_i32_0 = arith.constant 0 : i32
    %c0_i32_1 = arith.constant 0 : i32
    return %arg0, %c0_i32, %c0_i32_0 : i32, i32, i32
  }
  func.func @transform_1(%arg0: i32) -> (i32, i32) {
    %c0_i32 = arith.constant 0 : i32
    %c0_i32_0 = arith.constant 0 : i32
    %c0_i32_1 = arith.constant 0 : i32
    return %c0_i32, %c0_i32_0 : i32, i32
  }
  func.func @transform_2(%arg0: i32) -> (i32, i32) {
    %c0_i32 = arith.constant 0 : i32
    %c0_i32_0 = arith.constant 0 : i32
    %c0_i32_1 = arith.constant 0 : i32
    return %c0_i32, %c0_i32_0 : i32, i32
  }
  func.func @transform_3(%arg0: i32) -> (i32, i32, i32) {
    %c0_i32 = arith.constant 0 : i32
    %c0_i32_0 = arith.constant 0 : i32
    %c0_i32_1 = arith.constant 0 : i32
    return %arg0, %c0_i32, %c0_i32_0 : i32, i32, i32
  }
}

</mosaic_0001>

<llo_original>
// kernel: _prelayer_call.1
$region0: #{_prelayer_call.1}
  #allocation0 [shape = 'u32[]', space=smem, size = 0x4, offset = 0x4, fixed_abs, tag = 'smem constant byte address 0x4 - core index']
  #allocation1 [shape = 'u32[144,128]{1,0:T(1,128)}', space=vmem, size = 0x12000, scoped, tag = 'internal scratch']
  %s0 = inlined_call_operand.hbm [shape: f32[2,8,32], index: 0, kind: input, shape index: {}]
  %s1 = inlined_call_operand.hbm [shape: bf16[32,32], index: 1, kind: input, shape index: {}]
  %s2 = inlined_call_operand.hbm [shape: f32[8,32], index: 2, kind: input, shape index: {}]
  %s3 = inlined_call_operand.hbm [shape: f32[2,8,32], index: 3, kind: output, shape index: {}]
  %s4 = sld [smem:[#allocation0]]
  $region57: #{_prelayer_call.1} parent=0
    _
  %s6 = ssub.s32 1, %s4
  %s7 = scalar_select 0, %s6, %s4
  $region1: #{_prelayer_call.1} parent=0
    #allocation2 [shape = 'u8[8192]{0}', space=vmem, size = 0x2000, scoped, tag = 'input window, operand 0']
    #allocation3 [shape = 's32[2]{0}', space=sflag, size = 0x8, scoped, tag = 'scoped memory for _prelayer_call.1']
    #allocation4 [shape = 's32[2]{0}', space=sflag, size = 0x8, scoped, tag = 'scoped memory for _prelayer_call.1']
    #allocation5 [shape = 'u8[8192]{0}', space=vmem, size = 0x2000, scoped, tag = 'input window, operand 1, single buffered']
    #allocation6 [shape = 's32[1]{0}', space=sflag, size = 0x4, scoped, tag = 'scoped memory for _prelayer_call.1']
    #allocation7 [shape = 'u8[4096]{0}', space=vmem, size = 0x1000, scoped, tag = 'input window, operand 2, single buffered']
    #allocation8 [shape = 'u8[8192]{0}', space=vmem, size = 0x2000, scoped, tag = 'output window, operand 0']
    %8 = vsyncpa [#allocation3], 0
    %s9 = scalar_lea.sflag [#allocation3], 1
    %10 = vsyncpa %s9, 0
    %11 = vsyncpa [#allocation6], 0
    %12 = vsyncpa [#allocation4], 0
    %s13 = scalar_lea.sflag [#allocation4], 1
    %14 = vsyncpa %s13, 0
    loop: start=0, step=1, limit=4
    $region2: #{_prelayer_call.1} parent=1 // loop_pre_header
      _
    $region3: #{_prelayer_call.1} parent=1 // loop_header
      %s16 = sphi 0, %s20
      %p17 = scmp.ge.s32.totalorder %s16, 4
      %s26 = sphi 0, %s28
      %s29 = sphi 0, %s26
      %s30 = sphi 0, %s29
      %s46 = sphi 0, %s30
      %s50 = sphi 0, %s50
      %s52 = sphi 0, %s50
      %s53 = sphi 0, %s52
      %s67 = sphi 0, %s53
      %s71 = sphi 0, %s71
      %s73 = sphi 0, %s71
      %s74 = sphi 0, %s73
      %s88 = sphi 0, %s74
      %s94 = sphi 0, %s96
      %s97 = sphi 0, %s94
      %s98 = sphi 0, %s97
      %s114 = sphi 0, %s98
    $region4: #{_prelayer_call.1} parent=1 // loop_header_branch
      %19 = sbr.rel (%p17) target = $region8
    $region5: #{_prelayer_call.1} parent=1 // loop_body
      %s21 = ssub.s32 %s16, 1
      %s22 = ssub.s32 %s16, 2
      %s23 = sadd.s32 %s16, 1
      %s24 = ssub.s32 %s16, %s23
      %p25 = scmp.eq.s32.totalorder %s24, 0
      %s27 = sadd.s32 %s26, 1
      %s28 = scalar_select %p25, %s26, %s27
      %p31 = pneg %p25
      %p32 = scmp.eq.s32.totalorder %s16, 1
      %p33 = por %p31, %p32
      %p34 = scmp.ne.s32.totalorder %s26, %s29
      %p35 = scmp.eq.s32.totalorder %s16, 0
      %p36 = por %p34, %p35
      %p37 = scmp.ne.s32.totalorder %s26, %s29
      %p38 = scmp.eq.s32.totalorder %s21, 1
      %p39 = por %p37, %p38
      %p40 = scmp.ne.s32.totalorder %s29, %s30
      %p41 = scmp.eq.s32.totalorder %s21, 0
      %p42 = por %p40, %p41
      %p43 = scmp.ne.s32.totalorder %s29, %s30
      %p44 = scmp.eq.s32.totalorder %s22, 1
      %p45 = por %p43, %p44
      %p47 = scmp.ne.s32.totalorder %s30, %s46
      %p48 = scmp.eq.s32.totalorder %s22, 0
      %p49 = por %p47, %p48
      %s51 = sadd.s32 %s50, 1
      %p54 = scmp.eq.s32.totalorder %s16, 1
      %p55 = scmp.ne.s32.totalorder %s50, %s52
      %p56 = scmp.eq.s32.totalorder %s16, 0
      %p57 = por %p55, %p56
      %p58 = scmp.ne.s32.totalorder %s50, %s52
      %p59 = scmp.eq.s32.totalorder %s21, 1
      %p60 = por %p58, %p59
      %p61 = scmp.ne.s32.totalorder %s52, %s53
      %p62 = scmp.eq.s32.totalorder %s21, 0
      %p63 = por %p61, %p62
      %p64 = scmp.ne.s32.totalorder %s52, %s53
      %p65 = scmp.eq.s32.totalorder %s22, 1
      %p66 = por %p64, %p65
      %p68 = scmp.ne.s32.totalorder %s53, %s67
      %p69 = scmp.eq.s32.totalorder %s22, 0
      %p70 = por %p68, %p69
      %s72 = sadd.s32 %s71, 1
      %p75 = scmp.eq.s32.totalorder %s16, 1
      %p76 = scmp.ne.s32.totalorder %s71, %s73
      %p77 = scmp.eq.s32.totalorder %s16, 0
      %p78 = por %p76, %p77
      %p79 = scmp.ne.s32.totalorder %s71, %s73
      %p80 = scmp.eq.s32.totalorder %s21, 1
      %p81 = por %p79, %p80
      %p82 = scmp.ne.s32.totalorder %s73, %s74
      %p83 = scmp.eq.s32.totalorder %s21, 0
      %p84 = por %p82, %p83
      %p85 = scmp.ne.s32.totalorder %s73, %s74
      %p86 = scmp.eq.s32.totalorder %s22, 1
      %p87 = por %p85, %p86
      %p89 = scmp.ne.s32.totalorder %s74, %s88
      %p90 = scmp.eq.s32.totalorder %s22, 0
      %p91 = por %p89, %p90
      %s92 = ssub.s32 %s16, %s23
      %p93 = scmp.eq.s32.totalorder %s92, 0
      %s95 = sadd.s32 %s94, 1
      %s96 = scalar_select %p93, %s94, %s95
      %p99 = pneg %p93
      %p100 = scmp.eq.s32.totalorder %s16, 1
      %p101 = por %p99, %p100
      %p102 = scmp.ne.s32.totalorder %s94, %s97
      %p103 = scmp.eq.s32.totalorder %s16, 0
      %p104 = por %p102, %p103
      %p105 = scmp.ne.s32.totalorder %s94, %s97
      %p106 = scmp.eq.s32.totalorder %s21, 1
      %p107 = por %p105, %p106
      %p108 = scmp.ne.s32.totalorder %s97, %s98
      %p109 = scmp.eq.s32.totalorder %s21, 0
      %p110 = por %p108, %p109
      %p111 = scmp.ne.s32.totalorder %s97, %s98
      %p112 = scmp.eq.s32.totalorder %s22, 1
      %p113 = por %p111, %p112
      %p115 = scmp.ne.s32.totalorder %s98, %s114
      %p116 = scmp.eq.s32.totalorder %s22, 0
      %p117 = por %p115, %p116
      %p118 = scmp.le.s32.totalorder 1, %s16
      %p119 = scmp.lt.s32.totalorder %s16, 3
      %p120 = pnand %p118, %p119
      %p121 = pneg %p120
      // Predicated region
      $region9: #{_prelayer_call.1} parent=5 // pred_check
        _
      $region10: #{_prelayer_call.1} parent=5 // pred_check_branch
        %123 = sbr.rel (%p120) target = $region12
      $region11: #{_prelayer_call.1} parent=5 // pred_region
        %s124 = ssub.s32 %s16, 1
        // Predicated region
        $region13: #{_prelayer_call.1} parent=11 // pred_check
          %p125 = pneg %p63
        $region14: #{_prelayer_call.1} parent=11 // pred_check_branch
          %127 = sbr.rel (%p125) target = $region16
        $region15: #{_prelayer_call.1} parent=11 // pred_region
          %s129 = ssub.s32 256, 256
          %130 = vsyncadd [#allocation6], %s129
          %s131 = sshll.u32 [#allocation5], 4
          %s132 = int_to_ptr.vmem [resolvable:$true] %s131
          %137 = dma.hbm_to_vmem [thread:$0]  %s1, 256, %s132, [#allocation6], 64, 64, 4
        $region16: #{_prelayer_call.1} parent=11 // pred_fallthru
          _
        // Predicated region
        $region17: #{_prelayer_call.1} parent=11 // pred_check
          %p138 = pneg %p84
        $region18: #{_prelayer_call.1} parent=11 // pred_check_branch
          %140 = sbr.rel (%p138) target = $region20
        $region19: #{_prelayer_call.1} parent=11 // pred_region
          %s142 = ssub.s32 128, 128
          %143 = vsyncadd [#allocation6], %s142
          %s145 = sshll.u32 [#allocation7], 4
          %s146 = int_to_ptr.vmem [resolvable:$true] %s145
          %148 = dma.hbm_to_vmem [thread:$0]  %s2, 128, %s146, [#allocation6]
        $region20: #{_prelayer_call.1} parent=11 // pred_fallthru
          _
      $region12: #{_prelayer_call.1} parent=5 // pred_fallthru
        _
      %p149 = scmp.lt.s32.totalorder %s16, 2
      // Predicated region
      $region21: #{_prelayer_call.1} parent=5 // pred_check
        %p150 = pneg %p149
      $region22: #{_prelayer_call.1} parent=5 // pred_check_branch
        %152 = sbr.rel (%p150) target = $region24
      $region23: #{_prelayer_call.1} parent=5 // pred_region
        // Predicated region
        $region25: #{_prelayer_call.1} parent=23 // pred_check
          %p153 = pneg %p36
        $region26: #{_prelayer_call.1} parent=23 // pred_check_branch
          %155 = sbr.rel (%p153) target = $region28
        $region27: #{_prelayer_call.1} parent=23 // pred_region
          %s156 = sand.u32 %s26, 1
          %s157 = scalar_lea.sflag [#allocation3], %s156
          %s158 = sand.u32 %s26, 1
          %s159 = smul.addr %s158, 8
          %s160 = scalar_lea.vmem [#allocation2], %s159
          %s162 = ssub.s32 128, 128
          %163 = vsyncadd %s157, %s162
          %s164 = smul.addr %s16, 128
          %s165 = scalar_lea.hbm %s0, %s164
          %s167 = sshll.u32 %s160, 4
          %s168 = int_to_ptr.vmem [resolvable:$true] %s167
          %170 = dma.hbm_to_vmem [thread:$0]  %s165, 128, %s168, %s157
        $region28: #{_prelayer_call.1} parent=23 // pred_fallthru
          _
      $region24: #{_prelayer_call.1} parent=5 // pred_fallthru
        _
      %p171 = scmp.le.s32.totalorder 1, %s16
      %p172 = scmp.lt.s32.totalorder %s16, 3
      %p173 = pnand %p171, %p172
      %p174 = pneg %p173
      // Predicated region
      $region29: #{_prelayer_call.1} parent=5 // pred_check
        _
      $region30: #{_prelayer_call.1} parent=5 // pred_check_branch
        %176 = sbr.rel (%p173) target = $region32
      $region31: #{_prelayer_call.1} parent=5 // pred_region
        %s177 = ssub.s32 %s16, 1
        %s178 = sand.u32 %s29, 1
        %s179 = scalar_lea.sflag [#allocation3], %s178
        %s180 = sand.u32 %s29, 1
        %s181 = smul.addr %s180, 8
        %s182 = scalar_lea.vmem [#allocation2], %s181
        // Predicated region
        $region33: #{_prelayer_call.1} parent=31 // pred_check
          %p183 = pneg %p42
        $region34: #{_prelayer_call.1} parent=31 // pred_check_branch
          %185 = sbr.rel (%p183) target = $region36
        $region35: #{_prelayer_call.1} parent=31 // pred_region
          %186 = dma.done %s179, 128
        $region36: #{_prelayer_call.1} parent=31 // pred_fallthru
          _
        // Predicated region
        $region37: #{_prelayer_call.1} parent=31 // pred_check
          %p187 = pneg %p63
        $region38: #{_prelayer_call.1} parent=31 // pred_check_branch
          %189 = sbr.rel (%p187) target = $region40
        $region39: #{_prelayer_call.1} parent=31 // pred_region
          %190 = dma.done [#allocation6], 256
        $region40: #{_prelayer_call.1} parent=31 // pred_fallthru
          _
        // Predicated region
        $region41: #{_prelayer_call.1} parent=31 // pred_check
          %p191 = pneg %p84
        $region42: #{_prelayer_call.1} parent=31 // pred_check_branch
          %193 = sbr.rel (%p191) target = $region44
        $region43: #{_prelayer_call.1} parent=31 // pred_region
          %194 = dma.done [#allocation6], 128
        $region44: #{_prelayer_call.1} parent=31 // pred_fallthru
          _
        %s195 = sand.u32 %s29, 1
        %s196 = scalar_lea.sflag [#allocation3], %s195
        %s197 = sand.u32 %s29, 1
        %s198 = smul.addr %s197, 8
        %s199 = scalar_lea.vmem [#allocation2], %s198
        %p200 = pneg %p42
        %p201 = pneg %p39
        %p202 = pneg %p63
        %p203 = pneg %p60
        %p204 = pneg %p84
        %p205 = pneg %p81
        %p206 = pneg %p110
        %p207 = pneg %p107
        %s208 = sand.u32 %s97, 1
        %s209 = scalar_lea.sflag [#allocation4], %s208
        %s210 = sand.u32 %s97, 1
        %s211 = smul.addr %s210, 8
        %s212 = scalar_lea.vmem [#allocation8], %s211
        %v214 = vld [vmem:[%s182] sm:$0xff]
        %v215 = vpack.c.bf16 %v214, %v214
        %v216 = vld [vmem:[#allocation5] sm:$0xf]
        %v217 = vld [vmem:[#allocation5 + $0x4] sm:$0xf]
        %v218 = vld [vmem:[#allocation5 + $0x8] sm:$0xf]
        %v219 = vld [vmem:[#allocation5 + $0xc] sm:$0xf]
        %v224 = vunpack.c.l.b16 %v216
        %v225 = vunpack.c.l.b16 %v217
        %v226 = vunpack.c.l.b16 %v218
        %v227 = vunpack.c.l.b16 %v219
        %v228 = vpack.c.b16 %v225, %v224
        %v229 = vpack.c.b16 %v227, %v226
        %vm232 = vcmask 261120
        %v234 = vsel %vm232, %v215, 0
        %236 = vmatprep.subr.bf16.mxu0 0
        %237 = vmatpush1.bf16.msra.mxu0 %v228
        %238 = vmatprep.subr.bf16.mxu0 0
        %239 = vmatpush1.bf16.msra.mxu0 %v229
        %240 = vmatprep.subr.bf16.mxu0 0
        %241 = vmatpush1.bf16.msra.mxu0 0
        %242 = vmatprep.subr.bf16.mxu0 0
        %243 = vmatpush1.bf16.msra.mxu0 0
        %244 = vmatprep.subr.bf16.mxu0 0
        %245 = vmatpush1.bf16.msra.mxu0 0
        %246 = vmatprep.subr.bf16.mxu0 0
        %247 = vmatpush1.bf16.msra.mxu0 0
        %248 = vmatprep.subr.bf16.mxu0 0
        %249 = vmatpush1.bf16.msra.mxu0 0
        %250 = vmatprep.subr.bf16.mxu0 0
        %251 = vmatpush1.bf16.msra.mxu0 0
        %252 = vmatprep.subr.bf16.mxu0 0
        %253 = vmatpush1.bf16.msra.mxu0 0
        %254 = vmatprep.subr.bf16.mxu0 0
        %255 = vmatpush1.bf16.msra.mxu0 0
        %256 = vmatprep.subr.bf16.mxu0 0
        %257 = vmatpush1.bf16.msra.mxu0 0
        %258 = vmatprep.subr.bf16.mxu0 0
        %259 = vmatpush1.bf16.msra.mxu0 0
        %260 = vmatprep.subr.bf16.mxu0 0
        %261 = vmatpush1.bf16.msra.mxu0 0
        %262 = vmatprep.subr.bf16.mxu0 0
        %263 = vmatpush1.bf16.msra.mxu0 0
        %264 = vmatprep.subr.bf16.mxu0 0
        %265 = vmatpush1.bf16.msra.mxu0 0
        %266 = vmatprep.subr.bf16.mxu0 0
        %267 = vmatpush1.bf16.msra.mxu0 0
        %268 = vmatprep.mubr.bf16.mxu0 0
        %269 = vmatmul.mubr.bf16.gmra.mrb[0].mxu0 %v234
        %v270 = vpop.f32.mrb[0].mxu0
        %v271 = vadd.f32 0.0, %v270
        %v272 = vpop.f32.mrb[0].mxu0
        %v273 = vpop.f32.mrb[0].mxu0
        %v274 = vpop.f32.mrb[0].mxu0
        %275 = vdwg.mxu0
        %v276 = vld [vmem:[#allocation7] sm:$0xff]
        %v277 = vadd.f32 %v271, %v276
        %v278 = vtanh.pop %v277
        %279 = vst.msk [vmem:[%s212] sm:$0xff] %vm232, %v278
        %s280 = sand.u32 %s97, 1
        %s281 = scalar_lea.sflag [#allocation4], %s280
        %s282 = sand.u32 %s97, 1
        %s283 = smul.addr %s282, 8
        %s284 = scalar_lea.vmem [#allocation8], %s283
        // Predicated region
        $region45: #{_prelayer_call.1} parent=31 // pred_check
          %p285 = pneg %p107
        $region46: #{_prelayer_call.1} parent=31 // pred_check_branch
          %287 = sbr.rel (%p285) target = $region48
        $region47: #{_prelayer_call.1} parent=31 // pred_region
          %s289 = ssub.s32 128, 128
          %290 = vsyncadd %s281, %s289
          %s291 = smul.addr %s21, 128
          %s292 = scalar_lea.hbm %s3, %s291
          %s294 = sshll.u32 %s284, 4
          %s295 = int_to_ptr.vmem [resolvable:$true] %s294
          %297 = dma.vmem_to_hbm [thread:$0]  %s295, 128, %s292, %s281
        $region48: #{_prelayer_call.1} parent=31 // pred_fallthru
          _
      $region32: #{_prelayer_call.1} parent=5 // pred_fallthru
        _
      %p298 = scmp.le.s32.totalorder 2, %s16
      // Predicated region
      $region49: #{_prelayer_call.1} parent=5 // pred_check
        %p299 = pneg %p298
      $region50: #{_prelayer_call.1} parent=5 // pred_check_branch
        %301 = sbr.rel (%p299) target = $region52
      $region51: #{_prelayer_call.1} parent=5 // pred_region
        %s302 = ssub.s32 %s16, 2
        // Predicated region
        $region53: #{_prelayer_call.1} parent=51 // pred_check
          %p303 = pneg %p113
        $region54: #{_prelayer_call.1} parent=51 // pred_check_branch
          %305 = sbr.rel (%p303) target = $region56
        $region55: #{_prelayer_call.1} parent=51 // pred_region
          %s306 = sand.u32 %s98, 1
          %s307 = scalar_lea.sflag [#allocation4], %s306
          %s308 = sand.u32 %s98, 1
          %s309 = smul.addr %s308, 8
          %s310 = scalar_lea.vmem [#allocation8], %s309
          %311 = dma.done %s307, 128
        $region56: #{_prelayer_call.1} parent=51 // pred_fallthru
          _
      $region52: #{_prelayer_call.1} parent=5 // pred_fallthru
        _
    $region6: #{_prelayer_call.1} parent=1 // loop_footer
      %s20 = sadd.s32 1, %s16
    $region7: #{_prelayer_call.1} parent=1 // loop_footer_branch
      %15 = sbr.rel target = $region3
    $region8: #{_prelayer_call.1} parent=1 // loop_exit
      _
    %312 = vsyncpa [#allocation3], 1
    %s313 = scalar_lea.sflag [#allocation3], 1
    %314 = vsyncpa %s313, 1
    %315 = vsyncpa [#allocation6], 1
    %316 = vsyncpa [#allocation4], 1
    %s317 = scalar_lea.sflag [#allocation4], 1
    %318 = vsyncpa %s317, 1

</llo_original>
